<compile_context>
chip_gen: v6e
topology: v6e:2x2x1
jax: 0.10.0
libtpu: 0.0.40
codegen_flags: <defaults>
</compile_context>

<pallas_src>
import functools
import math

import jax
import jax.numpy as jnp
from jax.experimental import pallas as pl
from jax.experimental.pallas import tpu as pltpu


def _gat_kernel(h_ref, adj_ref, waug_ref, o_ref, f12_scr, whb_scr, *,
                n_nodes, f_out_p, d_col, alpha, concat):
    """One grid step processes a group of Bt graphs resident in VMEM.

    h_ref:    (Bt*N, Fin)      float32   (graphs flattened along rows)
    adj_ref:  (Bt, N, N)       int8      (only compared against 0)
    waug_ref: (Fin, Foutp+2)   float32   == [W_padded | W@a1 | W@a2]
    o_ref:    (Bt*N, Foutp)    float32
    f12_scr:  (Bt*N, 2)        float32   scratch, [f1 | f2] logit columns
    whb_scr:  (Bt*N, Faug)     bfloat16  scratch, [Wh | ... | 1] aggregation operand
    """
    N = n_nodes
    Bt = adj_ref.shape[0]
    BtN = h_ref.shape[0]

    # One fused MXU pass over the whole group: [Wh | Wh.a1 | Wh.a2].
    whf = jnp.dot(h_ref[...], waug_ref[...], preferred_element_type=jnp.float32)

    # Stash the f32 logit columns and the bf16 aggregation operand in VMEM
    # scratch so the fori_loop below only keeps ONE graph's (N,N) temporaries
    # live at a time (no multi-graph live ranges / vreg spills).
    f12_scr[...] = whf[:, f_out_p:f_out_p + 2]
    whb_scr[:, :f_out_p] = whf[:, :f_out_p].astype(jnp.bfloat16)
    # "Ones" column rides in a padded (or one extra) feature lane: the same MXU
    # pass that aggregates Wh also produces the softmax denominator, with f32
    # accumulation.
    whb_scr[:, d_col:d_col + 1] = jnp.ones((BtN, 1), jnp.bfloat16)

    neg_big = jnp.float32(-9e15)

    def body(b, carry):
        row0 = pl.multiple_of(b * N, N)
        rows = pl.ds(row0, N)
        f1 = f12_scr[rows, 0:1]                        # (N, 1) f32
        f2 = f12_scr[rows, 1:2]                        # (N, 1) f32

        # e[i,j] = leaky_relu(f1[i] + f2[j]); leaky-ReLU folded into the
        # adjacency mask so only one (N,N) temporary chain stays live.
        e = f1 + f2.T                                  # (N, N) f32
        masked = jnp.where(adj_ref[b] != 0,
                           jnp.where(e > 0, e, alpha * e),
                           neg_big)

        # Row softmax numerator in bf16 (packed EUP on v6e/v7x).  The max
        # element contributes exp(0)=1, so the denominator is always >= 1.
        m = jnp.max(masked, axis=-1, keepdims=True)
        p = jnp.exp((masked - m).astype(jnp.bfloat16))          # (N, N) bf16

        # Single bf16 MXU pass: un-normalised aggregation AND denominator.
        hpd = jnp.dot(p, whb_scr[rows, :], preferred_element_type=jnp.float32)
        denom = hpd[:, d_col:d_col + 1]
        hp = hpd[:, :f_out_p] * pl.reciprocal(denom, approx=True)  # EUP vrcp

        if concat:
            # ELU (alpha=1).  exp(min(x,0)) - 1 equals expm1(x) for x<=0 up to
            # ~1e-7 abs error (far below this kernel's bf16 noise floor);
            # jnp.expm1 is avoided only because its Mosaic lowering is not
            # guaranteed on all TPU generations.
            hp = jnp.where(hp > 0, hp, jnp.exp(jnp.minimum(hp, 0.0)) - 1.0)

        # Lane-dense (Foutp is a multiple of 128 when padding is on) store of
        # this graph's rows; no post-loop read-modify-write of the out block.
        o_ref[rows, :] = hp.astype(o_ref.dtype)
        return carry

    jax.lax.fori_loop(0, Bt, body, 0)


def _round_up(x, m):
    return (x + m - 1) // m * m


def _vmem_capacity_bytes():
    # Generation-aware VMEM capacity (128 MiB on v5e/v6e, 64 MiB per TC on v7x).
    try:
        cap = getattr(pltpu.get_tpu_info(), "vmem_capacity_bytes", None)
        if cap:
            return int(cap)
    except Exception:
        pass
    return 128 * 1024 * 1024


def gat_layer(h, adj, W, a, *, alpha=0.2, concat=True, graphs_per_step=8,
              pad_features_to_lanes=True):
    """GATLayer.forward.  h: (B,N,Fin), adj: (B,N,N), W: (Fin,Fout), a: (2*Fout,1)."""
    B, N, Fin = h.shape
    Fout = W.shape[1]

    W = W.astype(jnp.float32)
    a = a.astype(jnp.float32)

    # Lane-dense features: zero-pad W's output columns to a multiple of 128 so
    # result stores are unmasked full-lane vst's.  The padded columns are
    # exactly zero end-to-end and get sliced away below.
    if pad_features_to_lanes and Fout % 128 != 0:
        Foutp = _round_up(Fout, 128)
    else:
        Foutp = Fout
    Wp = jnp.pad(W, ((0, 0), (0, Foutp - Fout)))

    # Fused weight: one h @ Waug MXU pass yields [Wh | Wh.a1 | Wh.a2].
    a1, a2 = a[:Fout, :], a[Fout:, :]
    waug = jnp.concatenate([Wp, W @ a1, W @ a2], axis=1)            # (Fin, Foutp+2)

    # Denominator ("ones") column for the aggregation matmul: reuse the last
    # padded feature lane when one exists, otherwise append one extra lane.
    Faug = Foutp if Foutp > Fout else Foutp + 1
    d_col = Faug - 1

    # adj is only compared against 0 -> ship as int8 (exact mask, 4x less HBM
    # than f32 on the dominant B*N^2 stream).
    adj_i8 = (adj > 0).astype(jnp.int8)
    h = h.astype(jnp.float32)

    # ---- size the per-step block (Bt graphs) from the real VMEM budget ------
    vmem_cap = _vmem_capacity_bytes()
    budget = int(0.45 * vmem_cap)        # leave headroom for compiler scratch

    def step_bytes(bt):
        f32, bf16, i8 = 4, 2, 1
        rows = bt * N
        blocks = 2 * (rows * Fin * f32 + bt * N * N * i8 + rows * Foutp * f32)
        blocks += 2 * Fin * (Foutp + 2) * f32
        scratch = rows * (_round_up(2, 128) * f32 + _round_up(Faug, 128) * bf16)
        live = rows * _round_up(Foutp + 2, 128) * f32 + 6 * N * N * f32
        return blocks + scratch + live

    # Block row-counts must stay sublane(8)-aligned whenever the grid has >1 step.
    req = 8 // math.gcd(N, 8)
    Bt = max(1, min(int(graphs_per_step), B))
    Bt = _round_up(Bt, req)
    while Bt > req and step_bytes(Bt) > budget:
        Bt -= req
    # Keep >= 2 grid steps when possible so both TensorCores on dual-core parts
    # (v7x) get work under dimension_semantics=("parallel",).
    if B > 1 and pl.cdiv(B, Bt) < 2:
        cand = _round_up(pl.cdiv(B, 2), req)
        if pl.cdiv(B, cand) >= 2:
            Bt = cand

    num_groups = pl.cdiv(B, Bt)
    Bpad = num_groups * Bt
    if Bpad != B:
        h = jnp.pad(h, ((0, Bpad - B), (0, 0), (0, 0)))
        adj_i8 = jnp.pad(adj_i8, ((0, Bpad - B), (0, 0), (0, 0)))
    h2 = h.reshape(Bpad * N, Fin)

    vmem_limit = int(min(int(0.9 * vmem_cap),
                         max(32 * 1024 * 1024, int(1.5 * step_bytes(Bt)))))

    kernel = functools.partial(_gat_kernel, n_nodes=N, f_out_p=Foutp,
                               d_col=d_col, alpha=float(alpha),
                               concat=bool(concat))

    # TODO(synk): for very large N (a single (N,N) adjacency block no longer
    # fitting comfortably in VMEM, esp. v7x's 64 MiB), add a query-row tile
    # axis so adj/attention are processed in (TILE_I, N) slabs while the
    # (Bt*N, Faug) Wh slab stays resident (mark that axis "arbitrary").
    # TODO(synk): on v5e, if xprof shows exposed DMA on the adj stream, deepen
    # it with pipeline_mode=pl.Buffered(3) (VMEM is plentiful there).

    out2 = pl.pallas_call(
        kernel,
        out_shape=jax.ShapeDtypeStruct((Bpad * N, Foutp), jnp.float32),
        grid_spec=pltpu.PrefetchScalarGridSpec(
            num_scalar_prefetch=0,
            grid=(num_groups,),
            in_specs=[
                pl.BlockSpec((Bt * N, Fin), lambda g: (g, 0)),
                pl.BlockSpec((Bt, N, N), lambda g: (g, 0, 0)),
                pl.BlockSpec((Fin, Foutp + 2), lambda g: (0, 0)),
            ],
            out_specs=pl.BlockSpec((Bt * N, Foutp), lambda g: (g, 0)),
            scratch_shapes=[
                pltpu.VMEM((Bt * N, 2), jnp.float32),        # [f1 | f2]
                pltpu.VMEM((Bt * N, Faug), jnp.bfloat16),    # [Wh_bf16 | 1]
            ],
        ),
        compiler_params=pltpu.CompilerParams(
            dimension_semantics=("parallel",),
            vmem_limit_bytes=vmem_limit,
        ),
    )(h2, adj_i8, waug)

    return out2.reshape(Bpad, N, Foutp)[:B, :, :Fout]


def _xavier_uniform(key, shape, gain):
    fan_in, fan_out = shape[0], shape[1]
    bound = gain * (6.0 / (fan_in + fan_out)) ** 0.5
    return jax.random.uniform(key, shape, jnp.float32, -bound, bound)


def _reference(h, adj, W, a, alpha, concat):
    # Pure-JAX f32 reference of the torch forward, for a sanity check.
    Fout = W.shape[1]
    Wh = jnp.einsum("bnf,fo->bno", h, W)
    f1 = jnp.einsum("bno,o->bn", Wh, a[:Fout, 0])
    f2 = jnp.einsum("bno,o->bn", Wh, a[Fout:, 0])
    e = f1[:, :, None] + f2[:, None, :]
    e = jnp.where(e > 0, e, alpha * e)
    masked = jnp.where(adj > 0, e, -9e15)
    att = jax.nn.softmax(masked, axis=2)
    hp = jnp.einsum("bij,bjo->bio", att, Wh)
    return jnp.where(hp > 0, hp, jnp.expm1(hp)) if concat else hp


if __name__ == "__main__":
    # Small shapes consistent with DeepGS's gat_layers
    # (GATLayer(dim, dim, alpha=0.1, concat=True)).
    B, N = 4, 16
    in_features, out_features = 8, 32
    alpha, concat = 0.1, True

    key = jax.random.PRNGKey(0)
    k_w, k_a, k_h, k_adj = jax.random.split(key, 4)

    # Deterministic parameter init matching nn.init.xavier_uniform_(gain=1.414).
    W = _xavier_uniform(k_w, (in_features, out_features), gain=1.414)
    a = _xavier_uniform(k_a, (2 * out_features, 1), gain=1.414)

    h = jax.random.normal(k_h, (B, N, in_features), jnp.float32)
    adj = (jax.random.uniform(k_adj, (B, N, N)) > 0.5).astype(jnp.float32)
    # Ensure self-loops so every row has at least one unmasked entry.
    adj = jnp.maximum(adj, jnp.eye(N, dtype=jnp.float32)[None, :, :])

    out = gat_layer(h, adj, W, a, alpha=alpha, concat=concat, graphs_per_step=8)
    out = jax.block_until_ready(out)

    ref = _reference(h, adj, W, a, alpha, concat)
    assert out.shape == (B, N, out_features)
    # bf16 softmax numerator + bf16 aggregation operands (f32 accumulation) +
    # approx reciprocal: tolerance sized for ~1-2% relative error on O(1)
    # activations.
    err = float(jnp.max(jnp.abs(out - ref)))
    assert jnp.allclose(out, ref, atol=5e-2, rtol=5e-2), err

    print("KERNEL_OK")
</pallas_src>

<mosaic_0001>
module attributes {stable_mosaic.version = 11 : i64} {
  func.func @_gat_kernel(%arg0: i32, %arg1: memref<32x8xf32, #tpu.memory_space<vmem>>, %arg2: memref<2x16x16xi8, #tpu.memory_space<vmem>>, %arg3: memref<8x130xf32, #tpu.memory_space<vmem>>, %arg4: memref<32x128xf32, #tpu.memory_space<vmem>>, %arg5: memref<32x2xf32, #tpu.memory_space<vmem>>, %arg6: memref<32x128xbf16, #tpu.memory_space<vmem>>) attributes {dimension_semantics = [#tpu.dimension_semantics<parallel>], iteration_bounds = array<i64: 2>, scalar_prefetch = 0 : i64, scratch_operands = 2 : i64, tpu.core_type = #tpu.core_type<tc>, window_params = [{transform_indices = @transform_0, window_bounds = array<i64: 32, 8>}, {transform_indices = @transform_1, window_bounds = array<i64: 2, 16, 16>}, {pipeline_mode = #tpu.pipeline_mode<synchronous>, transform_indices = @transform_2, window_bounds = array<i64: 8, 130>}, {transform_indices = @transform_3, window_bounds = array<i64: 32, 128>}]} {
    %c0 = arith.constant 0 : index
    %c0_0 = arith.constant 0 : index
    %0 = vector.load %arg1[%c0, %c0_0] : memref<32x8xf32, #tpu.memory_space<vmem>>, vector<32x8xf32>
    %c0_1 = arith.constant 0 : index
    %c0_2 = arith.constant 0 : index
    %1 = vector.load %arg3[%c0_1, %c0_2] : memref<8x130xf32, #tpu.memory_space<vmem>>, vector<8x130xf32>
    %cst = arith.constant dense<0.000000e+00> : vector<32x130xf32>
    %2 = tpu.matmul %0, %1, %cst {dimension_numbers = #tpu.dot_dimension_numbers<[1], [0], [0], [1], [0, 0, 1, 1], [], []>} : vector<32x8xf32>, vector<8x130xf32>, vector<32x130xf32> -> vector<32x130xf32>
    %3 = vector.extract_strided_slice %2 {offsets = [0, 128], sizes = [32, 2], strides = [1, 1]} : vector<32x130xf32> to vector<32x2xf32>
    %c0_3 = arith.constant 0 : index
    %c0_4 = arith.constant 0 : index
    %4 = vector.load %arg5[%c0_3, %c0_4] : memref<32x2xf32, #tpu.memory_space<vmem>>, vector<32x2xf32>
    tpu.vector_store %arg5[%c0_3, %c0_4], %3 {strides = array<i32>} : memref<32x2xf32, #tpu.memory_space<vmem>>, vector<32x2xf32>,
    %5 = vector.extract_strided_slice %2 {offsets = [0, 0], sizes = [32, 128], strides = [1, 1]} : vector<32x130xf32> to vector<32x128xf32>
    %6 = arith.truncf %5 : vector<32x128xf32> to vector<32x128xbf16>
    %c0_5 = arith.constant 0 : index
    %c0_6 = arith.constant 0 : index
    %7 = vector.load %arg6[%c0_5, %c0_6] : memref<32x128xbf16, #tpu.memory_space<vmem>>, vector<32x128xbf16>
    tpu.vector_store %arg6[%c0_5, %c0_6], %6 {strides = array<i32>} : memref<32x128xbf16, #tpu.memory_space<vmem>>, vector<32x128xbf16>,
    %cst_7 = arith.constant 1.000000e+00 : bf16
    %8 = vector.broadcast %cst_7 : bf16 to vector<32x1xbf16>
    %c0_8 = arith.constant 0 : index
    %c127 = arith.constant 127 : index
    %9 = vector.load %arg6[%c0_8, %c127] : memref<32x128xbf16, #tpu.memory_space<vmem>>, vector<32x1xbf16>
    tpu.vector_store %arg6[%c0_8, %c127], %8 {strides = array<i32>} : memref<32x128xbf16, #tpu.memory_space<vmem>>, vector<32x1xbf16>,
    %cst_9 = arith.constant -9.000000e+15 : f32
    %c0_i32 = arith.constant 0 : i32
    %c2_i32 = arith.constant 2 : i32
    %10 = arith.addi %c0_i32, %c2_i32 : i32
    %c1_i32 = arith.constant 1 : i32
    scf.for %arg7 = %c0_i32 to %10 step %c1_i32  : i32 {
      %c16_i32 = arith.constant 16 : i32
      %11 = arith.muli %arg7, %c16_i32 : i32
      %12 = tpu.assume_multiple %11, 16 : i32
      %13 = arith.index_cast %12 : i32 to index
      %c0_11 = arith.constant 0 : index
      %14 = vector.load %arg5[%13, %c0_11] : memref<32x2xf32, #tpu.memory_space<vmem>>, vector<16x1xf32>
      %15 = arith.index_cast %12 : i32 to index
      %c1 = arith.constant 1 : index
      %16 = vector.load %arg5[%15, %c1] : memref<32x2xf32, #tpu.memory_space<vmem>>, vector<16x1xf32>
      %17 = tpu.transpose %16, [1, 0] : vector<16x1xf32> -> vector<1x16xf32>
      %18 = vector.broadcast %14 : vector<16x1xf32> to vector<16x16xf32>
      %19 = vector.broadcast %17 : vector<1x16xf32> to vector<16x16xf32>
      %20 = arith.addf %18, %19 : vector<16x16xf32>
      %21 = arith.index_cast %arg7 : i32 to index
      %c0_12 = arith.constant 0 : index
      %c0_13 = arith.constant 0 : index
      %22 = vector.load %arg2[%21, %c0_12, %c0_13] : memref<2x16x16xi8, #tpu.memory_space<vmem>>, vector<1x16x16xi8>
      %23 = vector.shape_cast %22 : vector<1x16x16xi8> to vector<16x16xi8>
      %c0_i8 = arith.constant 0 : i8
      %24 = vector.broadcast %c0_i8 : i8 to vector<16x16xi8>
      %25 = arith.cmpi ne, %23, %24 : vector<16x16xi8>
      %cst_14 = arith.constant 0.000000e+00 : f32
      %26 = vector.broadcast %cst_14 : f32 to vector<16x16xf32>
      %27 = arith.cmpf ogt, %20, %26 : vector<16x16xf32>
      %cst_15 = arith.constant 1.000000e-01 : f32
      %28 = vector.broadcast %cst_15 : f32 to vector<16x16xf32>
      %29 = arith.mulf %28, %20 : vector<16x16xf32>
      %30 = arith.select %27, %20, %29 : vector<16x16xi1>, vector<16x16xf32>
      %31 = vector.broadcast %cst_9 : f32 to vector<16x16xf32>
      %32 = arith.select %25, %30, %31 : vector<16x16xi1>, vector<16x16xf32>
      %cst_16 = arith.constant dense<0xFF800000> : vector<16xf32>
      %33 = vector.multi_reduction <maximumf>, %32, %cst_16 [1] : vector<16x16xf32> to vector<16xf32>
      %34 = vector.shape_cast %33 : vector<16xf32> to vector<16x1xf32>
      %35 = vector.broadcast %34 : vector<16x1xf32> to vector<16x16xf32>
      %36 = arith.subf %32, %35 : vector<16x16xf32>
      %37 = arith.truncf %36 : vector<16x16xf32> to vector<16x16xbf16>
      %38 = math.exp %37 : vector<16x16xbf16>
      %39 = arith.index_cast %12 : i32 to index
      %c0_17 = arith.constant 0 : index
      %40 = vector.load %arg6[%39, %c0_17] : memref<32x128xbf16, #tpu.memory_space<vmem>>, vector<16x128xbf16>
      %cst_18 = arith.constant dense<0.000000e+00> : vector<16x128xf32>
      %41 = tpu.matmul %38, %40, %cst_18 {dimension_numbers = #tpu.dot_dimension_numbers<[1], [0], [0], [1], [0, 0, 1, 1], [], []>} : vector<16x16xbf16>, vector<16x128xbf16>, vector<16x128xf32> -> vector<16x128xf32>
      %42 = vector.extract_strided_slice %41 {offsets = [0, 127], sizes = [16, 1], strides = [1, 1]} : vector<16x128xf32> to vector<16x1xf32>
      %43 = tpu.reciprocal %42 {approx = true} : vector<16x1xf32> -> vector<16x1xf32>
      %44 = vector.broadcast %43 : vector<16x1xf32> to vector<16x128xf32>
      %45 = arith.mulf %41, %44 : vector<16x128xf32>
      %cst_19 = arith.constant 0.000000e+00 : f32
      %46 = vector.broadcast %cst_19 : f32 to vector<16x128xf32>
      %47 = arith.cmpf ogt, %45, %46 : vector<16x128xf32>
      %cst_20 = arith.constant 0.000000e+00 : f32
      %48 = vector.broadcast %cst_20 : f32 to vector<16x128xf32>
      %49 = arith.minimumf %45, %48 : vector<16x128xf32>
      %50 = math.exp %49 : vector<16x128xf32>
      %cst_21 = arith.constant 1.000000e+00 : f32
      %51 = vector.broadcast %cst_21 : f32 to vector<16x128xf32>
      %52 = arith.subf %50, %51 : vector<16x128xf32>
      %53 = arith.select %47, %45, %52 : vector<16x128xi1>, vector<16x128xf32>
      %54 = arith.index_cast %12 : i32 to index
      %c0_22 = arith.constant 0 : index
      %55 = vector.load %arg4[%54, %c0_22] : memref<32x128xf32, #tpu.memory_space<vmem>>, vector<16x128xf32>
      tpu.vector_store %arg4[%54, %c0_22], %53 {strides = array<i32>} : memref<32x128xf32, #tpu.memory_space<vmem>>, vector<16x128xf32>,
    }
    %c2_i32_10 = arith.constant 2 : i32
    return
  }
  func.func @transform_0(%arg0: i32) -> (i32, i32) {
    %c0_i32 = arith.constant 0 : i32
    %c0_i32_0 = arith.constant 0 : i32
    return %arg0, %c0_i32 : i32, i32
  }
  func.func @transform_1(%arg0: i32) -> (i32, i32, i32) {
    %c0_i32 = arith.constant 0 : i32
    %c0_i32_0 = arith.constant 0 : i32
    %c0_i32_1 = arith.constant 0 : i32
    return %arg0, %c0_i32, %c0_i32_0 : i32, i32, i32
  }
  func.func @transform_2(%arg0: i32) -> (i32, i32) {
    %c0_i32 = arith.constant 0 : i32
    %c0_i32_0 = arith.constant 0 : i32
    %c0_i32_1 = arith.constant 0 : i32
    return %c0_i32, %c0_i32_0 : i32, i32
  }
  func.func @transform_3(%arg0: i32) -> (i32, i32) {
    %c0_i32 = arith.constant 0 : i32
    %c0_i32_0 = arith.constant 0 : i32
    return %arg0, %c0_i32 : i32, i32
  }
}

</mosaic_0001>

<llo_original>
// kernel: tpu_custom_call.1
$region0: #{tpu_custom_call.1}
  #allocation0 [shape = 'u32[]', space=smem, size = 0x4, offset = 0x4, fixed_abs, tag = 'smem constant byte address 0x4 - core index']
  #allocation1 [shape = 'u32[144,128]{1,0:T(1,128)}', space=vmem, size = 0x12000, scoped, tag = 'internal scratch']
  #allocation2 [shape = 'f32[32,2]{1,0:T(8,128)}', space=vmem, size = 0x4000, scoped, tag = 'scratch operand']
  #allocation3 [shape = 'bf16[32,128]{1,0:T(8,128)(2,1)}', space=vmem, size = 0x2000, scoped, tag = 'scratch operand']
  %s0 = inlined_call_operand.vmem [shape: f32[64,8], index: 0, kind: input, shape index: {}]
  %s1 = inlined_call_operand.vmem [shape: s8[4,16,16], index: 1, kind: input, shape index: {}]
  %s2 = inlined_call_operand.vmem [shape: f32[8,130], index: 2, kind: input, shape index: {}]
  %s3 = inlined_call_operand.hbm [shape: f32[64,128], index: 3, kind: output, shape index: {}]
  %s4 = sld [smem:[#allocation0]]
  $region52: #{tpu_custom_call.1} parent=0
    _
  %s6 = ssub.s32 1, %s4
  %s7 = scalar_select 0, %s6, %s4
  $region1: #{tpu_custom_call.1} parent=0
    #allocation4 [shape = 'u8[32768]{0}', space=vmem, size = 0x8000, scoped, tag = 'output window, operand 0']
    #allocation5 [shape = 's32[2]{0}', space=sflag, size = 0x8, scoped, tag = 'scoped memory for tpu_custom_call.1']
    %8 = vsyncpa [#allocation5], 0
    %s9 = scalar_lea.sflag [#allocation5], 1
    %10 = vsyncpa %s9, 0
    loop: start=0, step=1, limit=4
    $region2: #{tpu_custom_call.1} parent=1 // loop_pre_header
      _
    $region3: #{tpu_custom_call.1} parent=1 // loop_header
      %s12 = sphi 0, %s16
      %p13 = scmp.ge.s32.totalorder %s12, 4
      %s22 = sphi 0, %s24
      %s25 = sphi 0, %s22
      %s26 = sphi 0, %s25
      %s42 = sphi 0, %s26
      %s48 = sphi 0, %s50
      %s51 = sphi 0, %s48
      %s52 = sphi 0, %s51
      %s68 = sphi 0, %s52
      %s72 = sphi 0, %s72
      %s74 = sphi 0, %s72
      %s75 = sphi 0, %s74
      %s89 = sphi 0, %s75
      %s95 = sphi 0, %s97
      %s98 = sphi 0, %s95
      %s99 = sphi 0, %s98
      %s115 = sphi 0, %s99
    $region4: #{tpu_custom_call.1} parent=1 // loop_header_branch
      %15 = sbr.rel (%p13) target = $region8
    $region5: #{tpu_custom_call.1} parent=1 // loop_body
      %s17 = ssub.s32 %s12, 1
      %s18 = ssub.s32 %s12, 2
      %s19 = sadd.s32 %s12, 1
      %s20 = ssub.s32 %s12, %s19
      %p21 = scmp.eq.s32.totalorder %s20, 0
      %s23 = sadd.s32 %s22, 1
      %s24 = scalar_select %p21, %s22, %s23
      %p27 = pneg %p21
      %p28 = scmp.eq.s32.totalorder %s12, 1
      %p29 = por %p27, %p28
      %p30 = scmp.ne.s32.totalorder %s22, %s25
      %p31 = scmp.eq.s32.totalorder %s12, 0
      %p32 = por %p30, %p31
      %p33 = scmp.ne.s32.totalorder %s22, %s25
      %p34 = scmp.eq.s32.totalorder %s17, 1
      %p35 = por %p33, %p34
      %p36 = scmp.ne.s32.totalorder %s25, %s26
      %p37 = scmp.eq.s32.totalorder %s17, 0
      %p38 = por %p36, %p37
      %p39 = scmp.ne.s32.totalorder %s25, %s26
      %p40 = scmp.eq.s32.totalorder %s18, 1
      %p41 = por %p39, %p40
      %p43 = scmp.ne.s32.totalorder %s26, %s42
      %p44 = scmp.eq.s32.totalorder %s18, 0
      %p45 = por %p43, %p44
      %s46 = ssub.s32 %s12, %s19
      %p47 = scmp.eq.s32.totalorder %s46, 0
      %s49 = sadd.s32 %s48, 1
      %s50 = scalar_select %p47, %s48, %s49
      %p53 = pneg %p47
      %p54 = scmp.eq.s32.totalorder %s12, 1
      %p55 = por %p53, %p54
      %p56 = scmp.ne.s32.totalorder %s48, %s51
      %p57 = scmp.eq.s32.totalorder %s12, 0
      %p58 = por %p56, %p57
      %p59 = scmp.ne.s32.totalorder %s48, %s51
      %p60 = scmp.eq.s32.totalorder %s17, 1
      %p61 = por %p59, %p60
      %p62 = scmp.ne.s32.totalorder %s51, %s52
      %p63 = scmp.eq.s32.totalorder %s17, 0
      %p64 = por %p62, %p63
      %p65 = scmp.ne.s32.totalorder %s51, %s52
      %p66 = scmp.eq.s32.totalorder %s18, 1
      %p67 = por %p65, %p66
      %p69 = scmp.ne.s32.totalorder %s52, %s68
      %p70 = scmp.eq.s32.totalorder %s18, 0
      %p71 = por %p69, %p70
      %s73 = sadd.s32 %s72, 1
      %p76 = scmp.eq.s32.totalorder %s12, 1
      %p77 = scmp.ne.s32.totalorder %s72, %s74
      %p78 = scmp.eq.s32.totalorder %s12, 0
      %p79 = por %p77, %p78
      %p80 = scmp.ne.s32.totalorder %s72, %s74
      %p81 = scmp.eq.s32.totalorder %s17, 1
      %p82 = por %p80, %p81
      %p83 = scmp.ne.s32.totalorder %s74, %s75
      %p84 = scmp.eq.s32.totalorder %s17, 0
      %p85 = por %p83, %p84
      %p86 = scmp.ne.s32.totalorder %s74, %s75
      %p87 = scmp.eq.s32.totalorder %s18, 1
      %p88 = por %p86, %p87
      %p90 = scmp.ne.s32.totalorder %s75, %s89
      %p91 = scmp.eq.s32.totalorder %s18, 0
      %p92 = por %p90, %p91
      %s93 = ssub.s32 %s12, %s19
      %p94 = scmp.eq.s32.totalorder %s93, 0
      %s96 = sadd.s32 %s95, 1
      %s97 = scalar_select %p94, %s95, %s96
      %p100 = pneg %p94
      %p101 = scmp.eq.s32.totalorder %s12, 1
      %p102 = por %p100, %p101
      %p103 = scmp.ne.s32.totalorder %s95, %s98
      %p104 = scmp.eq.s32.totalorder %s12, 0
      %p105 = por %p103, %p104
      %p106 = scmp.ne.s32.totalorder %s95, %s98
      %p107 = scmp.eq.s32.totalorder %s17, 1
      %p108 = por %p106, %p107
      %p109 = scmp.ne.s32.totalorder %s98, %s99
      %p110 = scmp.eq.s32.totalorder %s17, 0
      %p111 = por %p109, %p110
      %p112 = scmp.ne.s32.totalorder %s98, %s99
      %p113 = scmp.eq.s32.totalorder %s18, 1
      %p114 = por %p112, %p113
      %p116 = scmp.ne.s32.totalorder %s99, %s115
      %p117 = scmp.eq.s32.totalorder %s18, 0
      %p118 = por %p116, %p117
      %p119 = scmp.le.s32.totalorder 1, %s12
      %p120 = scmp.lt.s32.totalorder %s12, 3
      %p121 = pnand %p119, %p120
      %p122 = pneg %p121
      // Predicated region
      $region9: #{tpu_custom_call.1} parent=5 // pred_check
        _
      $region10: #{tpu_custom_call.1} parent=5 // pred_check_branch
        %124 = sbr.rel (%p121) target = $region12
      $region11: #{tpu_custom_call.1} parent=5 // pred_region
        %s125 = ssub.s32 %s12, 1
        // Predicated region
        $region13: #{tpu_custom_call.1} parent=11 // pred_check
          %p126 = pneg %p85
        $region14: #{tpu_custom_call.1} parent=11 // pred_check_branch
          %128 = sbr.rel (%p126) target = $region16
        $region15: #{tpu_custom_call.1} parent=11 // pred_region
          _
        $region16: #{tpu_custom_call.1} parent=11 // pred_fallthru
          _
      $region12: #{tpu_custom_call.1} parent=5 // pred_fallthru
        _
      %p129 = scmp.lt.s32.totalorder %s12, 2
      // Predicated region
      $region17: #{tpu_custom_call.1} parent=5 // pred_check
        %p130 = pneg %p129
      $region18: #{tpu_custom_call.1} parent=5 // pred_check_branch
        %132 = sbr.rel (%p130) target = $region20
      $region19: #{tpu_custom_call.1} parent=5 // pred_region
        // Predicated region
        $region21: #{tpu_custom_call.1} parent=19 // pred_check
          %p133 = pneg %p32
        $region22: #{tpu_custom_call.1} parent=19 // pred_check_branch
          %135 = sbr.rel (%p133) target = $region24
        $region23: #{tpu_custom_call.1} parent=19 // pred_region
          %s136 = smul.u32 4, %s12
          %p137 = scmp.lt.s32.totalorder %s136, 7
          %s138 = scalar_select %p137, %s136, 7
          %s139 = smul.addr %s138, 8
          %s140 = scalar_lea.vmem %s0, %s139
          %s141 = smul.u32 4, %s12
        $region24: #{tpu_custom_call.1} parent=19 // pred_fallthru
          _
        // Predicated region
        $region25: #{tpu_custom_call.1} parent=19 // pred_check
          %p142 = pneg %p58
        $region26: #{tpu_custom_call.1} parent=19 // pred_check_branch
          %144 = sbr.rel (%p142) target = $region28
        $region27: #{tpu_custom_call.1} parent=19 // pred_region
          %s145 = smul.u32 2, %s12
          %p146 = scmp.lt.s32.totalorder %s145, 3
          %s147 = scalar_select %p146, %s145, 3
          %s148 = smul.addr %s147, 2
          %s149 = smul.addr %s148, 2
          %s150 = scalar_lea.vmem %s1, %s149
          %s151 = smul.u32 2, %s12
        $region28: #{tpu_custom_call.1} parent=19 // pred_fallthru
          _
      $region20: #{tpu_custom_call.1} parent=5 // pred_fallthru
        _
      %p152 = scmp.le.s32.totalorder 1, %s12
      %p153 = scmp.lt.s32.totalorder %s12, 3
      %p154 = pnand %p152, %p153
      %p155 = pneg %p154
      // Predicated region
      $region29: #{tpu_custom_call.1} parent=5 // pred_check
        _
      $region30: #{tpu_custom_call.1} parent=5 // pred_check_branch
        %157 = sbr.rel (%p154) target = $region32
      $region31: #{tpu_custom_call.1} parent=5 // pred_region
        %s158 = ssub.s32 %s12, 1
        %s159 = smul.u32 4, %s17
        %p160 = scmp.lt.s32.totalorder %s159, 7
        %s161 = scalar_select %p160, %s159, 7
        %s162 = smul.addr %s161, 8
        %s163 = scalar_lea.vmem %s0, %s162
        %p164 = pneg %p38
        %p165 = pneg %p35
        %s166 = smul.u32 2, %s17
        %p167 = scmp.lt.s32.totalorder %s166, 3
        %s168 = scalar_select %p167, %s166, 3
        %s169 = smul.addr %s168, 2
        %s170 = smul.addr %s169, 2
        %s171 = scalar_lea.vmem %s1, %s170
        %p172 = pneg %p64
        %p173 = pneg %p61
        %p174 = pneg %p85
        %p175 = pneg %p82
        %p176 = pneg %p111
        %p177 = pneg %p108
        %s178 = sand.u32 %s98, 1
        %s179 = scalar_lea.sflag [#allocation5], %s178
        %s180 = sand.u32 %s98, 1
        %s181 = smul.addr %s180, 32
        %s182 = scalar_lea.vmem [#allocation4], %s181
        %s183 = smul.u32 4, %s17
        %p184 = scmp.lt.s32.totalorder %s183, 7
        %s185 = scalar_select %p184, %s183, 7
        %s186 = smul.addr %s185, 8
        %s187 = scalar_lea.vmem %s0, %s186
        %s188 = smul.u32 4, %s17
        %s189 = smul.u32 2, %s17
        %p190 = scmp.lt.s32.totalorder %s189, 3
        %s191 = scalar_select %p190, %s189, 3
        %s192 = smul.addr %s191, 2
        %s193 = smul.addr %s192, 2
        %s194 = scalar_lea.vmem %s1, %s193
        %s195 = smul.u32 2, %s17
        %s196 = smul.u32 4, %s17
        %v201 = vld [vmem:[%s187] sm:$0xff]
        %v202 = vld [vmem:[%s187 + $0x8] sm:$0xff]
        %v203 = vld [vmem:[%s187 + $0x10] sm:$0xff]
        %v204 = vld [vmem:[%s187 + $0x18] sm:$0xff]
        %v205 = vld [vmem:[%s2] sm:$0xff]
        %v206 = vld [vmem:[%s2 + $0x8] sm:$0xff]
        %vm207 = vcmask 64512
        %v209 = vsel %vm207, %v201, 0
        %v212 = vsel %vm207, %v202, 0
        %v215 = vsel %vm207, %v203, 0
        %v218 = vsel %vm207, %v204, 0
        %220 = vmatprep.subr.mxu0 0.0
        %221 = vmatpush1.msra.mxu0 0.0
        %222 = vmatprep.subr.mxu0 0.0
        %223 = vmatpush1.msra.mxu0 0.0
        %224 = vmatprep.subr.mxu0 0.0
        %225 = vmatpush1.msra.mxu0 0.0
        %226 = vmatprep.subr.mxu0 0.0
        %227 = vmatpush1.msra.mxu0 0.0
        %228 = vmatprep.subr.mxu0 0.0
        %229 = vmatpush1.msra.mxu0 0.0
        %230 = vmatprep.subr.mxu0 0.0
        %231 = vmatpush1.msra.mxu0 0.0
        %232 = vmatprep.subr.mxu0 0.0
        %233 = vmatpush1.msra.mxu0 0.0
        %234 = vmatprep.subr.mxu0 0.0
        %235 = vmatpush1.msra.mxu0 0.0
        %236 = vmatprep.subr.mxu0 0.0
        %237 = vmatpush1.msra.mxu0 0.0
        %238 = vmatprep.subr.mxu0 0.0
        %239 = vmatpush1.msra.mxu0 0.0
        %240 = vmatprep.subr.mxu0 0.0
        %241 = vmatpush1.msra.mxu0 0.0
        %242 = vmatprep.subr.mxu0 0.0
        %243 = vmatpush1.msra.mxu0 0.0
        %244 = vmatprep.subr.mxu0 0.0
        %245 = vmatpush1.msra.mxu0 0.0
        %246 = vmatprep.subr.mxu0 0.0
        %247 = vmatpush1.msra.mxu0 0.0
        %248 = vmatprep.subr.mxu0 0.0
        %249 = vmatpush1.msra.mxu0 0.0
        %250 = vmatprep.subr.mxu0 %v206
        %251 = vmatpush1.msra.mxu0 %v205
        %252 = vmatprep.subr.mxu0 0.0
        %253 = vmatpush2.msra.mxu0 0.0
        %254 = vmatprep.subr.mxu0 0.0
        %255 = vmatpush2.msra.mxu0 0.0
        %256 = vmatprep.subr.mxu0 0.0
        %257 = vmatpush2.msra.mxu0 0.0
        %258 = vmatprep.subr.mxu0 0.0
        %259 = vmatpush2.msra.mxu0 0.0
        %260 = vmatprep.subr.mxu0 0.0
        %261 = vmatpush2.msra.mxu0 0.0
        %262 = vmatprep.subr.mxu0 0.0
        %263 = vmatpush2.msra.mxu0 0.0
        %264 = vmatprep.subr.mxu0 0.0
        %265 = vmatpush2.msra.mxu0 0.0
        %266 = vmatprep.subr.mxu0 0.0
        %267 = vmatpush2.msra.mxu0 0.0
        %268 = vmatprep.subr.mxu0 0.0
        %269 = vmatpush2.msra.mxu0 0.0
        %270 = vmatprep.subr.mxu0 0.0
        %271 = vmatpush2.msra.mxu0 0.0
        %272 = vmatprep.subr.mxu0 0.0
        %273 = vmatpush2.msra.mxu0 0.0
        %274 = vmatprep.subr.mxu0 0.0
        %275 = vmatpush2.msra.mxu0 0.0
        %276 = vmatprep.subr.mxu0 0.0
        %277 = vmatpush2.msra.mxu0 0.0
        %278 = vmatprep.subr.mxu0 0.0
        %279 = vmatpush2.msra.mxu0 0.0
        %280 = vmatprep.subr.mxu0 0.0
        %281 = vmatpush2.msra.mxu0 0.0
        %282 = vmatprep.subr.mxu0 0.0
        %283 = vmatpush2.msra.mxu0 0.0
        %284 = vmatprep.mubr.f32.mxu0 0.0
        %285 = vmatmul.mubr.f32.gmra.mxu0 %v209
        %v286 = vpop.f32.mrf.mxu0
        %v287 = vadd.f32 0.0, %v286
        %v288 = vpop.f32.mrf.mxu0
        %v289 = vadd.f32 0.0, %v288
        %290 = vmatprep.mubr.f32.mxu0 0.0
        %291 = vmatmul.mubr.f32.gmra.mxu0 %v212
        %v292 = vpop.f32.mrf.mxu0
        %v293 = vadd.f32 0.0, %v292
        %v294 = vpop.f32.mrf.mxu0
        %v295 = vadd.f32 0.0, %v294
        %296 = vmatprep.mubr.f32.mxu0 0.0
        %297 = vmatmul.mubr.f32.gmra.mxu0 %v215
        %v298 = vpop.f32.mrf.mxu0
        %v299 = vadd.f32 0.0, %v298
        %v300 = vpop.f32.mrf.mxu0
        %v301 = vadd.f32 0.0, %v300
        %302 = vmatprep.mubr.f32.mxu0 0.0
        %303 = vmatmul.mubr.f32.gmra.mxu0 %v218
        %v304 = vpop.f32.mrf.mxu0
        %v305 = vadd.f32 0.0, %v304
        %v306 = vpop.f32.mrf.mxu0
        %v307 = vadd.f32 0.0, %v306
        %308 = vdwg.mxu0
        %vm309 = vcmask 15360
        %310 = vst.msk [vmem:[#allocation2] sm:$0xff] %vm309, %v289
        %311 = vst.msk [vmem:[#allocation2 + $0x8] sm:$0xff] %vm309, %v295
        %312 = vst.msk [vmem:[#allocation2 + $0x10] sm:$0xff] %vm309, %v301
        %313 = vst.msk [vmem:[#allocation2 + $0x18] sm:$0xff] %vm309, %v307
        %v314 = vpack.c.bf16 %v293, %v287
        %v315 = vpack.c.bf16 %v305, %v299
        %v318 = vunpack.c.l.b16 %v314
        %v319 = vunpack.c.h.b16 %v314
        %v320 = vunpack.c.l.b16 %v315
        %v321 = vunpack.c.h.b16 %v315
        %v322 = vpack.c.b16 %v318, %v318
        %v323 = vpack.c.b16 %v319, %v319
        %v324 = vpack.c.b16 %v320, %v320
        %v325 = vpack.c.b16 %v321, %v321
        %330 = vst [vmem:[#allocation3] sm:$0xf] %v322
        %331 = vst [vmem:[#allocation3 + $0x4] sm:$0xf] %v323
        %332 = vst [vmem:[#allocation3 + $0x8] sm:$0xf] %v324
        %333 = vst [vmem:[#allocation3 + $0xc] sm:$0xf] %v325
        %vm334 = vcmask 1044472
        %335 = vst.msk [vmem:[#allocation3] sm:$0xf] %vm334, 1065369472
        %336 = vst.msk [vmem:[#allocation3 + $0x4] sm:$0xf] %vm334, 1065369472
        %337 = vst.msk [vmem:[#allocation3 + $0x8] sm:$0xf] %vm334, 1065369472
        %338 = vst.msk [vmem:[#allocation3 + $0xc] sm:$0xf] %vm334, 1065369472
        loop: start=0, step=1, limit=2
        $region33: #{tpu_custom_call.1} parent=31 // loop_pre_header
          _
        $region34: #{tpu_custom_call.1} parent=31 // loop_header
          %s340 = sphi 0, %s344
          %p341 = scmp.ge.s32.totalorder %s340, 2
        $region35: #{tpu_custom_call.1} parent=31 // loop_header_branch
          %343 = sbr.rel (%p341) target = $region39
        $region36: #{tpu_custom_call.1} parent=31 // loop_body
          %s345 = smul.u32 %s340, 16
          %s346 = scalar_lea.vmem [#allocation2], %s345
          %v347 = vld [vmem:[%s346] sm:$0xff]
          %v348 = vld [vmem:[%s346 + $0x8] sm:$0xff]
          %351 = vrot.lane.b32.xlu0 %v347, 127
          %v352 = vpop.permute.xlu0 %351
          %353 = vrot.lane.b32.xlu0 %v348, 127
          %v354 = vpop.permute.xlu0 %353
          %357 = vxpose.xlu0.b32.start [1/16] %v352, 128
          %358 = vxpose.xlu0.b32.cont [2/16] %v354, 128
          %359 = vxpose.xlu0.b32.cont [3/16] 0.0, 128
          %360 = vxpose.xlu0.b32.cont [4/16] 0.0, 128
          %361 = vxpose.xlu0.b32.cont [5/16] 0.0, 128
          %362 = vxpose.xlu0.b32.cont [6/16] 0.0, 128
          %363 = vxpose.xlu0.b32.cont [7/16] 0.0, 128
          %364 = vxpose.xlu0.b32.cont [8/16] 0.0, 128
          %365 = vxpose.xlu0.b32.cont [9/16] 0.0, 128
          %366 = vxpose.xlu0.b32.cont [10/16] 0.0, 128
          %367 = vxpose.xlu0.b32.cont [11/16] 0.0, 128
          %368 = vxpose.xlu0.b32.cont [12/16] 0.0, 128
          %369 = vxpose.xlu0.b32.cont [13/16] 0.0, 128
          %370 = vxpose.xlu0.b32.cont [14/16] 0.0, 128
          %371 = vxpose.xlu0.b32.cont [15/16] 0.0, 128
          %372 = vxpose.xlu0.b32.end [16/16] 0.0, 128
          %v373 = vpop.trf.xlu0
          %v374 = vpop.trf.xlu0
          %v375 = vpop.trf.xlu0
          %v376 = vpop.trf.xlu0
          %v377 = vpop.trf.xlu0
          %v378 = vpop.trf.xlu0
          %v379 = vpop.trf.xlu0
          %v380 = vpop.trf.xlu0
          %v381 = vpop.trf.xlu0
          %v382 = vpop.trf.xlu0
          %v383 = vpop.trf.xlu0
          %v384 = vpop.trf.xlu0
          %v385 = vpop.trf.xlu0
          %v386 = vpop.trf.xlu0
          %v387 = vpop.trf.xlu0
          %v388 = vpop.trf.xlu0
          %389 = vset.pattern.permute.xlu0 0
          %390 = vperm.xlu0 %389, %v347
          %v391 = vpop.permute.xlu0 %390
          %393 = vset.pattern.permute.xlu0 0
          %394 = vperm.xlu0 %393, %v348
          %v395 = vpop.permute.xlu0 %394
          %v397 = vlaneseq
          %v398 = vshrl.u32 %v397, 7
          %v399 = vsub.s32 0, %v398
          %v400 = vrot.slane %v373, %v399
          %v401 = vadd.f32 %v391, %v400
          %v402 = vadd.f32 %v395, %v400
          %s403 = smul.u32 %s340, 2
          %s404 = smul.addr %s403, 2
          %s405 = scalar_lea.vmem %s194, %s404
          %v406 = vld [vmem:[%s405] sm:$0x3]
          %v407 = vld [vmem:[%s405 + $0x2] sm:$0x3]
          %vm408 = vnez %v406
          %vm409 = vnez %v407
          %vm410 = vcmp.gt.f32.partialorder %v401, 0.0
          %vm411 = vcmp.gt.f32.partialorder %v402, 0.0
          %v412 = vmul.f32 %v401, 0.1
          %v413 = vmul.f32 %v402, 0.1
          %v414 = vsel %vm410, %v401, %v412
          %v415 = vsel %vm411, %v402, %v413
          %v416 = vsel %vm408, 16843009, 0
          %v417 = vsel %vm409, 16843009, 0
          %v418 = vunpack.c.0.s8 %v416
          %v419 = vunpack.c.0.s8 %v417
          %vm420 = vcmp.ne.s32.totalorder %v418, 0
          %vm421 = vcmp.ne.s32.totalorder %v419, 0
          %v422 = vsel %vm420, %v414, -9e+15
          %v423 = vsel %vm421, %v415, -9e+15
          %vm424 = vcmask 130048
          %v425 = vsel %vm424, %v422, -inf
          %426 = vmax.xlane.f32.xlu0 %v425
          %v427 = vpop.xlane.xlu0 %426
          %v428 = vsel %vm424, %v423, -inf
          %429 = vmax.xlane.f32.xlu0 %v428
          %v430 = vpop.xlane.xlu0 %429
          %v431 = vsub.f32 %v422, %v427
          %v432 = vsub.f32 %v423, %v430
          %v433 = vpack.c.bf16 %v432, %v431
          %v435 = vmul.bf16 %v433, 1069105081
          %v436 = vpow.bf16.pop %v435
          %s437 = sshra.s32 %s345, 3
          %s438 = sand.u32 %s345, 7
          %s439 = smul.addr %s437, 4
          %s440 = scalar_lea.vmem [#allocation3], %s439
          %v441 = vld [vmem:[%s440] sm:$0xf]
          %v442 = vld [vmem:[%s440 + $0x4] sm:$0xf]
          %v445 = vunpack.c.l.b16 %v441
          %v446 = vunpack.c.l.b16 %v442
          %v447 = vpack.c.b16 %v446, %v445
          %v450 = vsel %vm424, %v436, 0
          %452 = vmatprep.subr.bf16.mxu0 0
          %453 = vmatpush1.bf16.msra.mxu0 0
          %454 = vmatprep.subr.bf16.mxu0 0
          %455 = vmatpush1.bf16.msra.mxu0 0
          %456 = vmatprep.subr.bf16.mxu0 0
          %457 = vmatpush1.bf16.msra.mxu0 0
          %458 = vmatprep.subr.bf16.mxu0 0
          %459 = vmatpush1.bf16.msra.mxu0 0
          %460 = vmatprep.subr.bf16.mxu0 0
          %461 = vmatpush1.bf16.msra.mxu0 0
          %462 = vmatprep.subr.bf16.mxu0 0
          %463 = vmatpush1.bf16.msra.mxu0 0
          %464 = vmatprep.subr.bf16.mxu0 0
          %465 = vmatpush1.bf16.msra.mxu0 0
          %466 = vmatprep.subr.bf16.mxu0 0
          %467 = vmatpush1.bf16.msra.mxu0 %v447
          %468 = vmatprep.subr.bf16.mxu0 0
          %469 = vmatpush2.bf16.msra.mxu0 0
          %470 = vmatprep.subr.bf16.mxu0 0
          %471 = vmatpush2.bf16.msra.mxu0 0
          %472 = vmatprep.subr.bf16.mxu0 0
          %473 = vmatpush2.bf16.msra.mxu0 0
          %474 = vmatprep.subr.bf16.mxu0 0
          %475 = vmatpush2.bf16.msra.mxu0 0
          %476 = vmatprep.subr.bf16.mxu0 0
          %477 = vmatpush2.bf16.msra.mxu0 0
          %478 = vmatprep.subr.bf16.mxu0 0
          %479 = vmatpush2.bf16.msra.mxu0 0
          %480 = vmatprep.subr.bf16.mxu0 0
          %481 = vmatpush2.bf16.msra.mxu0 0
          %482 = vmatprep.subr.bf16.mxu0 0
          %483 = vmatpush2.bf16.msra.mxu0 0
          %484 = vmatprep.mubr.bf16.mxu0 0
          %485 = vmatmul.mubr.bf16.gmra.mxu0 %v450
          %v486 = vpop.f32.mrf.mxu0
          %v487 = vadd.f32 0.0, %v486
          %v488 = vpop.f32.mrf.mxu0
          %v489 = vpop.f32.mrf.mxu0
          %v490 = vadd.f32 0.0, %v489
          %v491 = vpop.f32.mrf.mxu0
          %492 = vdwg.mxu0
          %v493 = vrcp.pop %v487
          %v494 = vrcp.pop %v490
          %496 = vset.pattern.permute.xlu0 127
          %497 = vperm.xlu0 %496, %v493
          %v498 = vpop.permute.xlu0 %497
          %501 = vset.pattern.permute.xlu0 127
          %502 = vperm.xlu0 %501, %v494
          %v503 = vpop.permute.xlu0 %502
          %v505 = vmul.f32 %v487, %v498
          %v506 = vmul.f32 %v490, %v503
          %vm507 = vcmp.gt.f32.partialorder %v505, 0.0
          %vm508 = vcmp.gt.f32.partialorder %v506, 0.0
          %v509 = vmin.f32 %v505, 0.0
          %v510 = vmin.f32 %v506, 0.0
          %v511 = vmul.f32 %v509, 1.442695
          %v512 = vpow.pop %v511
          %v513 = vmul.f32 %v510, 1.442695
          %v514 = vpow.pop %v513
          %v515 = vsub.f32 %v512, 1.0
          %v516 = vsub.f32 %v514, 1.0
          %v517 = vsel %vm507, %v505, %v515
          %v518 = vsel %vm508, %v506, %v516
          %s519 = scalar_lea.vmem %s182, %s345 [#allocation4]
          %520 = vst [vmem:[%s519] sm:$0xff] %v517
          %521 = vst [vmem:[%s519 + $0x8] sm:$0xff] %v518
        $region37: #{tpu_custom_call.1} parent=31 // loop_footer
          %s344 = sadd.s32 1, %s340
        $region38: #{tpu_custom_call.1} parent=31 // loop_footer_branch
          %339 = sbr.rel target = $region34
        $region39: #{tpu_custom_call.1} parent=31 // loop_exit
          _
        %s522 = sand.u32 %s98, 1
        %s523 = scalar_lea.sflag [#allocation5], %s522
        %s524 = sand.u32 %s98, 1
        %s525 = smul.addr %s524, 32
        %s526 = scalar_lea.vmem [#allocation4], %s525
        // Predicated region
        $region40: #{tpu_custom_call.1} parent=31 // pred_check
          %p527 = pneg %p108
        $region41: #{tpu_custom_call.1} parent=31 // pred_check_branch
          %529 = sbr.rel (%p527) target = $region43
        $region42: #{tpu_custom_call.1} parent=31 // pred_region
          %s530 = smul.u32 4, %s17
          %s532 = ssub.s32 512, 512
          %533 = vsyncadd %s523, %s532
          %s534 = smul.addr %s530, 128
          %s535 = scalar_lea.hbm %s3, %s534
          %s536 = sshll.u32 %s526, 4
          %s537 = int_to_ptr.vmem [resolvable:$true] %s536
          %542 = dma.vmem_to_hbm [thread:$0]  %s537, 512, %s535, %s523, 128, 128, 8
        $region43: #{tpu_custom_call.1} parent=31 // pred_fallthru
          _
      $region32: #{tpu_custom_call.1} parent=5 // pred_fallthru
        _
      %p543 = scmp.le.s32.totalorder 2, %s12
      // Predicated region
      $region44: #{tpu_custom_call.1} parent=5 // pred_check
        %p544 = pneg %p543
      $region45: #{tpu_custom_call.1} parent=5 // pred_check_branch
        %546 = sbr.rel (%p544) target = $region47
      $region46: #{tpu_custom_call.1} parent=5 // pred_region
        %s547 = ssub.s32 %s12, 2
        // Predicated region
        $region48: #{tpu_custom_call.1} parent=46 // pred_check
          %p548 = pneg %p114
        $region49: #{tpu_custom_call.1} parent=46 // pred_check_branch
          %550 = sbr.rel (%p548) target = $region51
        $region50: #{tpu_custom_call.1} parent=46 // pred_region
          %s551 = sand.u32 %s99, 1
          %s552 = scalar_lea.sflag [#allocation5], %s551
          %s553 = sand.u32 %s99, 1
          %s554 = smul.addr %s553, 32
          %s555 = scalar_lea.vmem [#allocation4], %s554
          %556 = dma.done %s552, 512
        $region51: #{tpu_custom_call.1} parent=46 // pred_fallthru
          _
      $region47: #{tpu_custom_call.1} parent=5 // pred_fallthru
        _
    $region6: #{tpu_custom_call.1} parent=1 // loop_footer
      %s16 = sadd.s32 1, %s12
    $region7: #{tpu_custom_call.1} parent=1 // loop_footer_branch
      %11 = sbr.rel target = $region3
    $region8: #{tpu_custom_call.1} parent=1 // loop_exit
      _
    %557 = vsyncpa [#allocation5], 1
    %s558 = scalar_lea.sflag [#allocation5], 1
    %559 = vsyncpa %s558, 1

</llo_original>
